<compile_context>
chip_gen: v6e
topology: v6e:2x2x1
jax: 0.10.0
libtpu: 0.0.40
codegen_flags: <defaults>
</compile_context>

<pallas_src>
import jax
import jax.numpy as jnp
from jax.experimental import pallas as pl
from jax.experimental.pallas import tpu as pltpu

LANES = 128
SUBLANES = 8
MAX_TILE_ROWS = 2048  # (2048,128) f32 = 1 MiB; 2 inputs x 2 buffers = 4 MiB VMEM


def _round_up(x, m):
    return (x + m - 1) // m * m


def _partial_sums_kernel(x_ref, y_ref, sq_ref, abs_ref):
    # Upcast inside the kernel (v5e has no bf16 VPU; keeps HBM traffic narrow).
    d = x_ref[...].astype(jnp.float32) - y_ref[...].astype(jnp.float32)
    # Group rows into whole (8,128) vregs; summing over groups is elementwise
    # vreg adds on the VPU (free under a memory-bound roofline).
    d3 = d.reshape(-1, SUBLANES, LANES)
    sq_ref[...] = jnp.sum(d3 * d3, axis=0)
    abs_ref[...] = jnp.sum(jnp.abs(d3), axis=0)


def combined_loss(inputs, targets, weights=(0.5, 0.5)):
    """inputs/targets: arrays of identical shape (any float dtype).
    weights: length-2 static (Python) weights for [MSE, L1]."""
    assert inputs.shape == targets.shape
    total_n = inputs.size
    w0, w1 = float(weights[0]), float(weights[1])

    xf = inputs.reshape(-1)
    yf = targets.reshape(-1)

    rows = pl.cdiv(total_n, LANES)
    tile_rows = min(MAX_TILE_ROWS, _round_up(rows, SUBLANES))
    padded_rows = _round_up(rows, tile_rows)
    padded_n = padded_rows * LANES
    if padded_n != total_n:
        # Zero padding contributes 0 to both sums; the true N is used below.
        xf = jnp.pad(xf, (0, padded_n - total_n))
        yf = jnp.pad(yf, (0, padded_n - total_n))

    x2d = xf.reshape(padded_rows, LANES)
    y2d = yf.reshape(padded_rows, LANES)

    num_blocks = padded_rows // tile_rows

    sq_part, abs_part = pl.pallas_call(
        _partial_sums_kernel,
        out_shape=(
            jax.ShapeDtypeStruct((num_blocks * SUBLANES, LANES), jnp.float32),
            jax.ShapeDtypeStruct((num_blocks * SUBLANES, LANES), jnp.float32),
        ),
        grid=(num_blocks,),
        in_specs=[
            pl.BlockSpec((tile_rows, LANES), lambda i: (i, 0)),
            pl.BlockSpec((tile_rows, LANES), lambda i: (i, 0)),
        ],
        out_specs=(
            pl.BlockSpec((SUBLANES, LANES), lambda i: (i, 0)),
            pl.BlockSpec((SUBLANES, LANES), lambda i: (i, 0)),
        ),
        compiler_params=pltpu.CompilerParams(
            dimension_semantics=("parallel",)),
    )(x2d, y2d)

    # Tiny epilogue: cross-lane reduce of the per-block partials + weighting.
    inv_n = 1.0 / float(total_n)
    mse = jnp.sum(sq_part) * inv_n     # nn.MSELoss (mean reduction)
    mae = jnp.sum(abs_part) * inv_n    # nn.L1Loss  (mean reduction)
    return w0 * mse + w1 * mae


if __name__ == "__main__":
    key = jax.random.PRNGKey(0)
    k1, k2 = jax.random.split(key)

    # Small NCHW shapes consistent with a regression task.
    x = jax.random.normal(k1, (2, 4, 16, 16), dtype=jnp.float32)
    y = jax.random.normal(k2, (2, 4, 16, 16), dtype=jnp.float32)

    # Deterministic module "parameters": default equal weights for 2 losses.
    weights = (0.5, 0.5)

    loss = combined_loss(x, y, weights)
    loss = jax.block_until_ready(loss)

    # Pure-JAX reference of the PyTorch semantics.
    d = x - y
    ref = weights[0] * jnp.mean(d * d) + weights[1] * jnp.mean(jnp.abs(d))
    assert jnp.allclose(loss, ref, rtol=1e-5, atol=1e-6), (loss, ref)

    print("KERNEL_OK")
</pallas_src>

<mosaic_0001>
module attributes {stable_mosaic.version = 11 : i64} {
  func.func @_partial_sums_kernel(%arg0: i32, %arg1: memref<16x128xf32, #tpu.memory_space<vmem>>, %arg2: memref<16x128xf32, #tpu.memory_space<vmem>>, %arg3: memref<8x128xf32, #tpu.memory_space<vmem>>, %arg4: memref<8x128xf32, #tpu.memory_space<vmem>>) attributes {dimension_semantics = [#tpu.dimension_semantics<parallel>], iteration_bounds = array<i64: 1>, scalar_prefetch = 0 : i64, scratch_operands = 0 : i64, tpu.core_type = #tpu.core_type<tc>, window_params = [{transform_indices = @transform_0, window_bounds = array<i64: 16, 128>}, {transform_indices = @transform_1, window_bounds = array<i64: 16, 128>}, {transform_indices = @transform_2, window_bounds = array<i64: 8, 128>}, {transform_indices = @transform_3, window_bounds = array<i64: 8, 128>}]} {
    %c0 = arith.constant 0 : index
    %c0_0 = arith.constant 0 : index
    %0 = vector.load %arg1[%c0, %c0_0] : memref<16x128xf32, #tpu.memory_space<vmem>>, vector<16x128xf32>
    %c0_1 = arith.constant 0 : index
    %c0_2 = arith.constant 0 : index
    %1 = vector.load %arg2[%c0_1, %c0_2] : memref<16x128xf32, #tpu.memory_space<vmem>>, vector<16x128xf32>
    %2 = arith.subf %0, %1 : vector<16x128xf32>
    %3 = vector.shape_cast %2 : vector<16x128xf32> to vector<2x8x128xf32>
    %4 = arith.mulf %3, %3 : vector<2x8x128xf32>
    %cst = arith.constant dense<0.000000e+00> : vector<8x128xf32>
    %5 = vector.multi_reduction <add>, %4, %cst [0] : vector<2x8x128xf32> to vector<8x128xf32>
    %c0_3 = arith.constant 0 : index
    %c0_4 = arith.constant 0 : index
    %6 = vector.load %arg3[%c0_3, %c0_4] : memref<8x128xf32, #tpu.memory_space<vmem>>, vector<8x128xf32>
    tpu.vector_store %arg3[%c0_3, %c0_4], %5 {strides = array<i32>} : memref<8x128xf32, #tpu.memory_space<vmem>>, vector<8x128xf32>,
    %7 = math.absf %3 : vector<2x8x128xf32>
    %cst_5 = arith.constant dense<0.000000e+00> : vector<8x128xf32>
    %8 = vector.multi_reduction <add>, %7, %cst_5 [0] : vector<2x8x128xf32> to vector<8x128xf32>
    %c0_6 = arith.constant 0 : index
    %c0_7 = arith.constant 0 : index
    %9 = vector.load %arg4[%c0_6, %c0_7] : memref<8x128xf32, #tpu.memory_space<vmem>>, vector<8x128xf32>
    tpu.vector_store %arg4[%c0_6, %c0_7], %8 {strides = array<i32>} : memref<8x128xf32, #tpu.memory_space<vmem>>, vector<8x128xf32>,
    return
  }
  func.func @transform_0(%arg0: i32) -> (i32, i32) {
    %c0_i32 = arith.constant 0 : i32
    %c0_i32_0 = arith.constant 0 : i32
    return %arg0, %c0_i32 : i32, i32
  }
  func.func @transform_1(%arg0: i32) -> (i32, i32) {
    %c0_i32 = arith.constant 0 : i32
    %c0_i32_0 = arith.constant 0 : i32
    return %arg0, %c0_i32 : i32, i32
  }
  func.func @transform_2(%arg0: i32) -> (i32, i32) {
    %c0_i32 = arith.constant 0 : i32
    %c0_i32_0 = arith.constant 0 : i32
    return %arg0, %c0_i32 : i32, i32
  }
  func.func @transform_3(%arg0: i32) -> (i32, i32) {
    %c0_i32 = arith.constant 0 : i32
    %c0_i32_0 = arith.constant 0 : i32
    return %arg0, %c0_i32 : i32, i32
  }
}

</mosaic_0001>

<llo_original>
// kernel: tpu_custom_call.1
$region0: #{tpu_custom_call.1}
  #allocation0 [shape = 'u32[]', space=smem, size = 0x4, offset = 0x4, fixed_abs, tag = 'smem constant byte address 0x4 - core index']
  #allocation1 [shape = 'u32[144,128]{1,0:T(1,128)}', space=vmem, size = 0x12000, scoped, tag = 'internal scratch']
  %s0 = inlined_call_operand.hbm [shape: f32[16,128], index: 0, kind: input, shape index: {}]
  %s1 = inlined_call_operand.hbm [shape: f32[16,128], index: 1, kind: input, shape index: {}]
  %s2 = inlined_call_operand.hbm [shape: f32[8,128], index: 2, kind: output, shape index: {0}]
  %s3 = inlined_call_operand.hbm [shape: f32[8,128], index: 3, kind: output, shape index: {1}]
  %4 = xla_tuple %s2, %s3
  %s5 = sld [smem:[#allocation0]]
  $region34: #{tpu_custom_call.1} parent=0
    _
  %s7 = ssub.s32 1, %s5
  %s8 = scalar_select 0, %s7, %s5
  $region1: #{tpu_custom_call.1} parent=0
    #allocation2 [shape = 'u8[8192]{0}', space=vmem, size = 0x2000, scoped, tag = 'input window, operand 0, single buffered']
    #allocation3 [shape = 's32[1]{0}', space=sflag, size = 0x4, scoped, tag = 'scoped memory for tpu_custom_call.1']
    #allocation4 [shape = 's32[1]{0}', space=sflag, size = 0x4, scoped, tag = 'scoped memory for tpu_custom_call.1']
    #allocation5 [shape = 'u8[8192]{0}', space=vmem, size = 0x2000, scoped, tag = 'input window, operand 1, single buffered']
    #allocation6 [shape = 's32[1]{0}', space=sflag, size = 0x4, scoped, tag = 'scoped memory for tpu_custom_call.1']
    #allocation7 [shape = 'u8[4096]{0}', space=vmem, size = 0x1000, scoped, tag = 'output window, operand 0, single buffered']
    #allocation8 [shape = 'u8[4096]{0}', space=vmem, size = 0x1000, scoped, tag = 'output window, operand 1, single buffered']
    #allocation9 [shape = 's32[1]{0}', space=sflag, size = 0x4, scoped, tag = 'scoped memory for tpu_custom_call.1']
    %9 = vsyncpa [#allocation3], 0
    %10 = vsyncpa [#allocation6], 0
    %11 = vsyncpa [#allocation4], 0
    %12 = vsyncpa [#allocation9], 0
    // Predicated region
    $region2: #{tpu_custom_call.1} parent=1 // pred_check
      _
    $region3: #{tpu_custom_call.1} parent=1 // pred_check_branch
      %14 = sbr.rel (0) target = $region5
    $region4: #{tpu_custom_call.1} parent=1 // pred_region
      %s16 = ssub.s32 256, 256
      %17 = vsyncadd [#allocation3], %s16
      %s18 = sshll.u32 [#allocation2], 4
      %s19 = int_to_ptr.vmem [resolvable:$true] %s18
      %24 = dma.hbm_to_vmem [thread:$0]  %s0, 256, %s19, [#allocation3], 128, 128, 8
    $region5: #{tpu_custom_call.1} parent=1 // pred_fallthru
      _
    // Predicated region
    $region6: #{tpu_custom_call.1} parent=1 // pred_check
      _
    $region7: #{tpu_custom_call.1} parent=1 // pred_check_branch
      %26 = sbr.rel (0) target = $region9
    $region8: #{tpu_custom_call.1} parent=1 // pred_region
      %s28 = ssub.s32 256, 256
      %29 = vsyncadd [#allocation6], %s28
      %s30 = sshll.u32 [#allocation5], 4
      %s31 = int_to_ptr.vmem [resolvable:$true] %s30
      %36 = dma.hbm_to_vmem [thread:$0]  %s1, 256, %s31, [#allocation6], 128, 128, 8
    $region9: #{tpu_custom_call.1} parent=1 // pred_fallthru
      _
    // Predicated region
    $region10: #{tpu_custom_call.1} parent=1 // pred_check
      _
    $region11: #{tpu_custom_call.1} parent=1 // pred_check_branch
      %38 = sbr.rel (0) target = $region13
    $region12: #{tpu_custom_call.1} parent=1 // pred_region
      %39 = dma.done [#allocation3], 256
    $region13: #{tpu_custom_call.1} parent=1 // pred_fallthru
      _
    // Predicated region
    $region14: #{tpu_custom_call.1} parent=1 // pred_check
      _
    $region15: #{tpu_custom_call.1} parent=1 // pred_check_branch
      %41 = sbr.rel (0) target = $region17
    $region16: #{tpu_custom_call.1} parent=1 // pred_region
      %42 = dma.done [#allocation6], 256
    $region17: #{tpu_custom_call.1} parent=1 // pred_fallthru
      _
    %v43 = vld [vmem:[#allocation2] sm:$0xff]
    %v44 = vld [vmem:[#allocation2 + $0x8] sm:$0xff]
    %v45 = vld [vmem:[#allocation5] sm:$0xff]
    %v46 = vld [vmem:[#allocation5 + $0x8] sm:$0xff]
    %v47 = vsub.f32 %v43, %v45
    %v48 = vsub.f32 %v44, %v46
    %v49 = vmul.f32 %v47, %v47
    %v50 = vmul.f32 %v48, %v48
    %v51 = vadd.f32 %v49, %v50
    %52 = vst [vmem:[#allocation7] sm:$0xff] %v51
    %v53 = vand.u32 2147483647, %v47
    %v54 = vand.u32 2147483647, %v48
    %v55 = vadd.f32 %v53, %v54
    %56 = vst [vmem:[#allocation8] sm:$0xff] %v55
    // Predicated region
    $region18: #{tpu_custom_call.1} parent=1 // pred_check
      _
    $region19: #{tpu_custom_call.1} parent=1 // pred_check_branch
      %58 = sbr.rel (0) target = $region21
    $region20: #{tpu_custom_call.1} parent=1 // pred_region
      %s60 = ssub.s32 128, 128
      %61 = vsyncadd [#allocation4], %s60
      %s63 = sshll.u32 [#allocation7], 4
      %s64 = int_to_ptr.vmem [resolvable:$true] %s63
      %66 = dma.vmem_to_hbm [thread:$0]  %s64, 128, %s2, [#allocation4]
    $region21: #{tpu_custom_call.1} parent=1 // pred_fallthru
      _
    // Predicated region
    $region22: #{tpu_custom_call.1} parent=1 // pred_check
      _
    $region23: #{tpu_custom_call.1} parent=1 // pred_check_branch
      %68 = sbr.rel (0) target = $region25
    $region24: #{tpu_custom_call.1} parent=1 // pred_region
      %s70 = ssub.s32 128, 128
      %71 = vsyncadd [#allocation9], %s70
      %s73 = sshll.u32 [#allocation8], 4
      %s74 = int_to_ptr.vmem [resolvable:$true] %s73
      %76 = dma.vmem_to_hbm [thread:$0]  %s74, 128, %s3, [#allocation9]
    $region25: #{tpu_custom_call.1} parent=1 // pred_fallthru
      _
    // Predicated region
    $region26: #{tpu_custom_call.1} parent=1 // pred_check
      _
    $region27: #{tpu_custom_call.1} parent=1 // pred_check_branch
      %78 = sbr.rel (0) target = $region29
    $region28: #{tpu_custom_call.1} parent=1 // pred_region
      %79 = dma.done [#allocation4], 128
    $region29: #{tpu_custom_call.1} parent=1 // pred_fallthru
      _
    // Predicated region
    $region30: #{tpu_custom_call.1} parent=1 // pred_check
      _
    $region31: #{tpu_custom_call.1} parent=1 // pred_check_branch
      %81 = sbr.rel (0) target = $region33
    $region32: #{tpu_custom_call.1} parent=1 // pred_region
      %82 = dma.done [#allocation9], 128
    $region33: #{tpu_custom_call.1} parent=1 // pred_fallthru
      _
    %83 = vsyncpa [#allocation3], 1
    %84 = vsyncpa [#allocation6], 1
    %85 = vsyncpa [#allocation4], 1
    %86 = vsyncpa [#allocation9], 1

</llo_original>
